<compile_context>
chip_gen: v5e
topology: v5e:2x2
jax: 0.10.0
libtpu: 0.0.40
codegen_flags: <defaults>
</compile_context>

<pallas_src>
import functools

import jax
import jax.numpy as jnp
from jax.experimental import pallas as pl
from jax.experimental.pallas import tpu as pltpu


_LANE = 128
_N_PAR = 2                          # leading parallel grid axis (megacore on v7x)
_TM_CAP = 1024                      # max row tile
_TILE_BUDGET = 20 * 1024 * 1024     # VMEM estimate budget used to size the row tile
_VMEM_LIMIT = 40 * 1024 * 1024      # scoped VMEM limit (above defaults, below physical)


def _per_row_kl(inv_t, s_raw, t_raw):
    """Per-sample sum_c p_t * (log p_t - log p_s); returns (tm, 1) f32."""
    s = s_raw.astype(jnp.float32) * inv_t
    t = t_raw.astype(jnp.float32) * inv_t

    s_shift = s - jnp.max(s, axis=1, keepdims=True)
    s_lse = jnp.log(jnp.sum(jnp.exp(s_shift), axis=1, keepdims=True))

    t_shift = t - jnp.max(t, axis=1, keepdims=True)
    t_exp = jnp.exp(t_shift)
    t_sum = jnp.sum(t_exp, axis=1, keepdims=True)
    t_lse = jnp.log(t_sum)

    # log p_t - log p_s = (t_shift - t_lse) - (s_shift - s_lse)
    diff = (t_shift - s_shift) + (s_lse - t_lse)
    num = jnp.sum(t_exp * diff, axis=1, keepdims=True)   # (tm, 1)
    return num / t_sum                                    # divide tm values, not tm*C


def _kd_kernel(inv_t_ref, *refs, inv_n, has_factor):
    if has_factor:
        s_ref, t_ref, f_ref, out_ref, acc_ref = refs
    else:
        s_ref, t_ref, out_ref, acc_ref = refs
        f_ref = None

    i = pl.program_id(1)   # reduction axis over row tiles (grid axis 0 is parallel)

    @pl.when(i == 0)
    def _():
        acc_ref[...] = jnp.zeros_like(acc_ref)

    per_row = _per_row_kl(inv_t_ref[0], s_ref[...], t_ref[...])   # (tm, 1) f32
    if has_factor:
        per_row = per_row * f_ref[...].astype(jnp.float32)
    acc_ref[...] += per_row

    @pl.when(i == pl.num_programs(1) - 1)
    def _():
        total = jnp.sum(acc_ref[...], axis=0, keepdims=True) * jnp.float32(inv_n)
        # Per-core partial broadcast into this core's (8, 128) output block;
        # the wrapper reads element [0, 0] of each block and sums.
        out_ref[...] = jnp.broadcast_to(total, out_ref.shape)


def kd_loss(student, teacher, temperature, factor=None, *, tm=None):
    """Pallas equivalent of KD.forward(student, teacher, temperature, factor)."""
    N, C = student.shape
    assert teacher.shape == (N, C)

    in_bytes = max(jnp.dtype(student.dtype).itemsize, jnp.dtype(teacher.dtype).itemsize)
    row_align = 16 if in_bytes < 4 else 8

    if tm is None:
        # 2 inputs x 2 pipeline buffers at the HBM dtype + ~8 f32 temporaries/row.
        per_row_bytes = C * (2 * 2 * in_bytes + 8 * 4)
        tm = min(_TM_CAP, max(row_align, _TILE_BUDGET // per_row_bytes))
        tm = max(row_align, (tm // row_align) * row_align)

    rows_per_core = -(-N // _N_PAR)
    rows_per_core = -(-rows_per_core // row_align) * row_align
    tm = max(row_align, (min(tm, rows_per_core) // row_align) * row_align)
    steps = -(-rows_per_core // tm)
    n_pad = _N_PAR * steps * tm

    if n_pad != N:
        # Zero logits in both student & teacher give exactly zero KL per padded row.
        pad = ((0, n_pad - N), (0, 0))
        student = jnp.pad(student, pad)
        teacher = jnp.pad(teacher, pad)

    has_factor = factor is not None
    inputs = [student, teacher]
    in_specs = [
        pl.BlockSpec((tm, C), lambda c, i, it: (c * steps + i, 0)),
        pl.BlockSpec((tm, C), lambda c, i, it: (c * steps + i, 0)),
    ]
    if has_factor:
        f = jnp.broadcast_to(jnp.asarray(factor, jnp.float32).reshape(-1, 1), (N, 1))
        if n_pad != N:
            f = jnp.pad(f, ((0, n_pad - N), (0, 0)))
        inputs.append(f)
        in_specs.append(pl.BlockSpec((tm, 1), lambda c, i, it: (c * steps + i, 0)))

    inv_t = jnp.asarray([1.0 / float(temperature)], jnp.float32)

    kernel = functools.partial(_kd_kernel, inv_n=1.0 / N, has_factor=has_factor)

    out = pl.pallas_call(
        kernel,
        out_shape=jax.ShapeDtypeStruct((_N_PAR * 8, _LANE), jnp.float32),
        grid_spec=pltpu.PrefetchScalarGridSpec(
            num_scalar_prefetch=1,
            grid=(_N_PAR, steps),
            in_specs=in_specs,
            out_specs=pl.BlockSpec((8, _LANE), lambda c, i, it: (c, 0)),
            scratch_shapes=[pltpu.VMEM((tm, 1), jnp.float32)],
        ),
        compiler_params=pltpu.CompilerParams(
            dimension_semantics=("parallel", "arbitrary"),
            vmem_limit_bytes=_VMEM_LIMIT,
        ),
    )(inv_t, *inputs)

    partials = out.reshape(_N_PAR, 8, _LANE)[:, 0, 0]
    return jnp.sum(partials)


def kd_ref(student, teacher, temperature, factor=None):
    """Pure-JAX reference matching the PyTorch forward."""
    s = student.astype(jnp.float32) / temperature
    t = teacher.astype(jnp.float32) / temperature
    log_ps = jax.nn.log_softmax(s, axis=1)
    pt = jax.nn.softmax(t, axis=1)
    kl = pt * (jnp.log(pt) - log_ps)
    per = kl.sum(axis=1)
    if factor is not None:
        per = per * jnp.asarray(factor, jnp.float32)
    return per.mean()


if __name__ == "__main__":
    key = jax.random.PRNGKey(0)
    k1, k2, k3 = jax.random.split(key, 3)

    N, C = 16, 32
    student = jax.random.normal(k1, (N, C), jnp.float32)
    teacher = jax.random.normal(k2, (N, C), jnp.float32)
    temperature = 4.0
    factor = jax.random.uniform(k3, (N,), jnp.float32)

    # Case 1: factor=None
    loss = kd_loss(student, teacher, temperature)
    jax.block_until_ready(loss)
    ref = kd_ref(student, teacher, temperature)
    assert jnp.allclose(loss, ref, rtol=1e-4, atol=1e-5), (loss, ref)

    # Case 2: per-sample factor
    loss_f = kd_loss(student, teacher, temperature, factor)
    jax.block_until_ready(loss_f)
    ref_f = kd_ref(student, teacher, temperature, factor)
    assert jnp.allclose(loss_f, ref_f, rtol=1e-4, atol=1e-5), (loss_f, ref_f)

    # Case 3: sample count not divisible by the tile grid (exercises zero-row padding)
    N3 = 12
    loss_p = kd_loss(student[:N3], teacher[:N3], temperature, factor[:N3])
    jax.block_until_ready(loss_p)
    ref_p = kd_ref(student[:N3], teacher[:N3], temperature, factor[:N3])
    assert jnp.allclose(loss_p, ref_p, rtol=1e-4, atol=1e-5), (loss_p, ref_p)

    # Case 4: bf16 logits kept in HBM, upcast inside the kernel
    s_bf = student.astype(jnp.bfloat16)
    t_bf = teacher.astype(jnp.bfloat16)
    loss_b = kd_loss(s_bf, t_bf, temperature)
    jax.block_until_ready(loss_b)
    ref_b = kd_ref(s_bf, t_bf, temperature)
    assert jnp.allclose(loss_b, ref_b, rtol=1e-3, atol=1e-4), (loss_b, ref_b)

    print("KERNEL_OK")
</pallas_src>

<mosaic_0001>
module attributes {stable_mosaic.version = 11 : i64} {
  func.func @_kd_kernel(%arg0: i32, %arg1: i32, %arg2: memref<1xf32, #tpu.memory_space<smem>>, %arg3: memref<8x32xf32, #tpu.memory_space<vmem>>, %arg4: memref<8x32xf32, #tpu.memory_space<vmem>>, %arg5: memref<8x128xf32, #tpu.memory_space<vmem>>, %arg6: memref<8x1xf32, #tpu.memory_space<vmem>>) attributes {dimension_semantics = [#tpu.dimension_semantics<parallel>, #tpu.dimension_semantics<arbitrary>], iteration_bounds = array<i64: 2, 1>, scalar_prefetch = 1 : i64, scratch_operands = 1 : i64, tpu.core_type = #tpu.core_type<tc>, window_params = [{transform_indices = @transform_0, window_bounds = array<i64: 8, 32>}, {transform_indices = @transform_1, window_bounds = array<i64: 8, 32>}, {transform_indices = @transform_2, window_bounds = array<i64: 8, 128>}]} {
    %c0_i32 = arith.constant 0 : i32
    %0 = arith.cmpi eq, %arg1, %c0_i32 : i32
    %1 = arith.extui %0 : i1 to i32
    %c0_i32_0 = arith.constant 0 : i32
    %2 = arith.cmpi ne, %1, %c0_i32_0 : i32
    scf.if %2 {
      %cst_15 = arith.constant 0.000000e+00 : f32
      %40 = vector.broadcast %cst_15 : f32 to vector<8x1xf32>
      %c0_16 = arith.constant 0 : index
      %c0_17 = arith.constant 0 : index
      %41 = vector.load %arg6[%c0_16, %c0_17] : memref<8x1xf32, #tpu.memory_space<vmem>>, vector<8x1xf32>
      tpu.vector_store %arg6[%c0_16, %c0_17], %40 {strides = array<i32>} : memref<8x1xf32, #tpu.memory_space<vmem>>, vector<8x1xf32>,
    } else {
    }
    %c0 = arith.constant 0 : index
    %3 = memref.load %arg2[%c0] : memref<1xf32, #tpu.memory_space<smem>>
    %c0_1 = arith.constant 0 : index
    %c0_2 = arith.constant 0 : index
    %4 = vector.load %arg3[%c0_1, %c0_2] : memref<8x32xf32, #tpu.memory_space<vmem>>, vector<8x32xf32>
    %c0_3 = arith.constant 0 : index
    %c0_4 = arith.constant 0 : index
    %5 = vector.load %arg4[%c0_3, %c0_4] : memref<8x32xf32, #tpu.memory_space<vmem>>, vector<8x32xf32>
    %6 = vector.broadcast %3 : f32 to vector<8x32xf32>
    %7 = arith.mulf %4, %6 : vector<8x32xf32>
    %8 = vector.broadcast %3 : f32 to vector<8x32xf32>
    %9 = arith.mulf %5, %8 : vector<8x32xf32>
    %cst = arith.constant dense<0xFF800000> : vector<8xf32>
    %10 = vector.multi_reduction <maximumf>, %7, %cst [1] : vector<8x32xf32> to vector<8xf32>
    %11 = vector.shape_cast %10 : vector<8xf32> to vector<8x1xf32>
    %12 = vector.broadcast %11 : vector<8x1xf32> to vector<8x32xf32>
    %13 = arith.subf %7, %12 : vector<8x32xf32>
    %14 = math.exp %13 : vector<8x32xf32>
    %cst_5 = arith.constant dense<0.000000e+00> : vector<8xf32>
    %15 = vector.multi_reduction <add>, %14, %cst_5 [1] : vector<8x32xf32> to vector<8xf32>
    %16 = vector.shape_cast %15 : vector<8xf32> to vector<8x1xf32>
    %17 = math.log %16 : vector<8x1xf32>
    %cst_6 = arith.constant dense<0xFF800000> : vector<8xf32>
    %18 = vector.multi_reduction <maximumf>, %9, %cst_6 [1] : vector<8x32xf32> to vector<8xf32>
    %19 = vector.shape_cast %18 : vector<8xf32> to vector<8x1xf32>
    %20 = vector.broadcast %19 : vector<8x1xf32> to vector<8x32xf32>
    %21 = arith.subf %9, %20 : vector<8x32xf32>
    %22 = math.exp %21 : vector<8x32xf32>
    %cst_7 = arith.constant dense<0.000000e+00> : vector<8xf32>
    %23 = vector.multi_reduction <add>, %22, %cst_7 [1] : vector<8x32xf32> to vector<8xf32>
    %24 = vector.shape_cast %23 : vector<8xf32> to vector<8x1xf32>
    %25 = math.log %24 : vector<8x1xf32>
    %26 = arith.subf %21, %13 : vector<8x32xf32>
    %27 = arith.subf %17, %25 : vector<8x1xf32>
    %28 = vector.broadcast %27 : vector<8x1xf32> to vector<8x32xf32>
    %29 = arith.addf %26, %28 : vector<8x32xf32>
    %30 = arith.mulf %22, %29 : vector<8x32xf32>
    %cst_8 = arith.constant dense<0.000000e+00> : vector<8xf32>
    %31 = vector.multi_reduction <add>, %30, %cst_8 [1] : vector<8x32xf32> to vector<8xf32>
    %32 = vector.shape_cast %31 : vector<8xf32> to vector<8x1xf32>
    %33 = arith.divf %32, %24 : vector<8x1xf32>
    %c0_9 = arith.constant 0 : index
    %c0_10 = arith.constant 0 : index
    %34 = vector.load %arg6[%c0_9, %c0_10] : memref<8x1xf32, #tpu.memory_space<vmem>>, vector<8x1xf32>
    %35 = arith.addf %34, %33 : vector<8x1xf32>
    %c0_11 = arith.constant 0 : index
    %c0_12 = arith.constant 0 : index
    %36 = vector.load %arg6[%c0_11, %c0_12] : memref<8x1xf32, #tpu.memory_space<vmem>>, vector<8x1xf32>
    tpu.vector_store %arg6[%c0_11, %c0_12], %35 {strides = array<i32>} : memref<8x1xf32, #tpu.memory_space<vmem>>, vector<8x1xf32>,
    %c0_i32_13 = arith.constant 0 : i32
    %37 = arith.cmpi eq, %arg1, %c0_i32_13 : i32
    %38 = arith.extui %37 : i1 to i32
    %c0_i32_14 = arith.constant 0 : i32
    %39 = arith.cmpi ne, %38, %c0_i32_14 : i32
    scf.if %39 {
      %c0_15 = arith.constant 0 : index
      %c0_16 = arith.constant 0 : index
      %40 = vector.load %arg6[%c0_15, %c0_16] : memref<8x1xf32, #tpu.memory_space<vmem>>, vector<8x1xf32>
      %cst_17 = arith.constant dense<0.000000e+00> : vector<1xf32>
      %41 = vector.multi_reduction <add>, %40, %cst_17 [0] : vector<8x1xf32> to vector<1xf32>
      %42 = vector.shape_cast %41 : vector<1xf32> to vector<1x1xf32>
      %cst_18 = arith.constant 6.250000e-02 : f32
      %43 = vector.broadcast %cst_18 : f32 to vector<1x1xf32>
      %44 = arith.mulf %42, %43 : vector<1x1xf32>
      %45 = vector.shape_cast %44 : vector<1x1xf32> to vector<1x1xf32>
      %46 = vector.broadcast %45 : vector<1x1xf32> to vector<8x128xf32>
      %c0_19 = arith.constant 0 : index
      %c0_20 = arith.constant 0 : index
      %47 = vector.load %arg5[%c0_19, %c0_20] : memref<8x128xf32, #tpu.memory_space<vmem>>, vector<8x128xf32>
      tpu.vector_store %arg5[%c0_19, %c0_20], %46 {strides = array<i32>} : memref<8x128xf32, #tpu.memory_space<vmem>>, vector<8x128xf32>,
    } else {
    }
    return
  }
  func.func @transform_0(%arg0: i32, %arg1: i32, %arg2: memref<1xf32, #tpu.memory_space<smem>>) -> (i32, i32) {
    %c1_i32 = arith.constant 1 : i32
    %0 = arith.muli %arg0, %c1_i32 : i32
    %1 = arith.addi %0, %arg1 : i32
    %c0_i32 = arith.constant 0 : i32
    %c0_i32_0 = arith.constant 0 : i32
    return %1, %c0_i32 : i32, i32
  }
  func.func @transform_1(%arg0: i32, %arg1: i32, %arg2: memref<1xf32, #tpu.memory_space<smem>>) -> (i32, i32) {
    %c1_i32 = arith.constant 1 : i32
    %0 = arith.muli %arg0, %c1_i32 : i32
    %1 = arith.addi %0, %arg1 : i32
    %c0_i32 = arith.constant 0 : i32
    %c0_i32_0 = arith.constant 0 : i32
    return %1, %c0_i32 : i32, i32
  }
  func.func @transform_2(%arg0: i32, %arg1: i32, %arg2: memref<1xf32, #tpu.memory_space<smem>>) -> (i32, i32) {
    %c0_i32 = arith.constant 0 : i32
    %c0_i32_0 = arith.constant 0 : i32
    return %arg0, %c0_i32 : i32, i32
  }
}

</mosaic_0001>

<llo_original>
// kernel: tpu_custom_call.1
$region0: #{tpu_custom_call.1}
  #allocation0 [shape = 'u32[]', space=smem, size = 0x4, offset = 0x4, fixed_abs, tag = 'smem constant byte address 0x4 - core index']
  #allocation1 [shape = 'u32[72,128]{1,0:T(1,128)}', space=vmem, size = 0x9000, scoped, tag = 'internal scratch']
  #allocation2 [shape = 'f32[8,1]{1,0:T(8,128)}', space=vmem, size = 0x1000, scoped, tag = 'scratch operand']
  #allocation3 [shape = 's32[1]{0}', space=sflag, size = 0x4, scoped, tag = 'scoped memory for tpu_custom_call.1']
  #allocation4 [shape = 'f32[1]{0:T(128)S(6)}', space=smem, size = 0x200, scoped, tag = 'prefetched SMEM operand 0']
  %s0 = inlined_call_operand.<no memory space> [shape: f32[1], index: 0, kind: input, shape index: {}]
  %s1 = inlined_call_operand.hbm [shape: f32[16,32], index: 1, kind: input, shape index: {}]
  %s2 = inlined_call_operand.hbm [shape: f32[16,32], index: 2, kind: input, shape index: {}]
  %s3 = inlined_call_operand.hbm [shape: f32[16,128], index: 3, kind: output, shape index: {}]
  %s4 = sld [smem:[#allocation0]]
  $region57: #{tpu_custom_call.1} parent=0
    _
  %s6 = ssub.s32 1, %s4
  %s7 = scalar_select 0, %s6, %s4
  %8 = sst [smem:[#allocation4]] %s0
  $region1: #{tpu_custom_call.1} parent=0
    #allocation5 [shape = 'u8[8192]{0}', space=vmem, size = 0x2000, scoped, tag = 'input window, operand 1']
    #allocation6 [shape = 's32[2]{0}', space=sflag, size = 0x8, scoped, tag = 'scoped memory for tpu_custom_call.1']
    #allocation7 [shape = 's32[2]{0}', space=sflag, size = 0x8, scoped, tag = 'scoped memory for tpu_custom_call.1']
    #allocation8 [shape = 'u8[8192]{0}', space=vmem, size = 0x2000, scoped, tag = 'input window, operand 2']
    #allocation9 [shape = 's32[2]{0}', space=sflag, size = 0x8, scoped, tag = 'scoped memory for tpu_custom_call.1']
    #allocation10 [shape = 'u8[8192]{0}', space=vmem, size = 0x2000, scoped, tag = 'output window, operand 0']
    %9 = vsyncpa [#allocation6], 0
    %s10 = scalar_lea.sflag [#allocation6], 1
    %11 = vsyncpa %s10, 0
    %12 = vsyncpa [#allocation9], 0
    %s13 = scalar_lea.sflag [#allocation9], 1
    %14 = vsyncpa %s13, 0
    %15 = vsyncpa [#allocation7], 0
    %s16 = scalar_lea.sflag [#allocation7], 1
    %17 = vsyncpa %s16, 0
    loop: start=0, step=1, limit=4
    $region2: #{tpu_custom_call.1} parent=1 // loop_pre_header
      _
    $region3: #{tpu_custom_call.1} parent=1 // loop_header
      %s19 = sphi 0, %s23
      %p20 = scmp.ge.s32.totalorder %s19, 4
      %s26 = sphi 0, %s38
      %s27 = sphi 0, %s34
      %s28 = sphi 0, %s26
      %s29 = sphi 0, %s27
      %s30 = sphi 0, %s28
      %s31 = sphi 0, %s29
      %s43 = sphi 0, %s45
      %s46 = sphi 0, %s43
      %s47 = sphi 0, %s46
      %s63 = sphi 0, %s47
      %s71 = sphi 0, %s73
      %s74 = sphi 0, %s71
      %s75 = sphi 0, %s74
      %s91 = sphi 0, %s75
      %s97 = sphi 0, %s99
      %s100 = sphi 0, %s97
      %s101 = sphi 0, %s100
      %s117 = sphi 0, %s101
    $region4: #{tpu_custom_call.1} parent=1 // loop_header_branch
      %22 = sbr.rel (%p20) target = $region8
    $region5: #{tpu_custom_call.1} parent=1 // loop_body
      %s24 = ssub.s32 %s19, 1
      %s25 = ssub.s32 %s19, 2
      %s32 = sadd.s32 1, %s27
      %p33 = scmp.ge.s32.totalorder %s32, 1
      %s34 = scalar_select %p33, 0, %s32
      %s35 = sadd.s32 1, %s26
      %s36 = scalar_select %p33, %s35, %s26
      %p37 = scmp.ge.s32.totalorder %s36, 2
      %s38 = scalar_select %p37, 0, %s36
      %s39 = sadd.s32 %s26, %s27
      %s40 = sadd.s32 %s38, %s34
      %s41 = ssub.s32 %s39, %s40
      %p42 = scmp.eq.s32.totalorder %s41, 0
      %s44 = sadd.s32 %s43, 1
      %s45 = scalar_select %p42, %s43, %s44
      %p48 = pneg %p42
      %p49 = scmp.eq.s32.totalorder %s19, 1
      %p50 = por %p48, %p49
      %p51 = scmp.ne.s32.totalorder %s43, %s46
      %p52 = scmp.eq.s32.totalorder %s19, 0
      %p53 = por %p51, %p52
      %p54 = scmp.ne.s32.totalorder %s43, %s46
      %p55 = scmp.eq.s32.totalorder %s24, 1
      %p56 = por %p54, %p55
      %p57 = scmp.ne.s32.totalorder %s46, %s47
      %p58 = scmp.eq.s32.totalorder %s24, 0
      %p59 = por %p57, %p58
      %p60 = scmp.ne.s32.totalorder %s46, %s47
      %p61 = scmp.eq.s32.totalorder %s25, 1
      %p62 = por %p60, %p61
      %p64 = scmp.ne.s32.totalorder %s47, %s63
      %p65 = scmp.eq.s32.totalorder %s25, 0
      %p66 = por %p64, %p65
      %s67 = sadd.s32 %s26, %s27
      %s68 = sadd.s32 %s38, %s34
      %s69 = ssub.s32 %s67, %s68
      %p70 = scmp.eq.s32.totalorder %s69, 0
      %s72 = sadd.s32 %s71, 1
      %s73 = scalar_select %p70, %s71, %s72
      %p76 = pneg %p70
      %p77 = scmp.eq.s32.totalorder %s19, 1
      %p78 = por %p76, %p77
      %p79 = scmp.ne.s32.totalorder %s71, %s74
      %p80 = scmp.eq.s32.totalorder %s19, 0
      %p81 = por %p79, %p80
      %p82 = scmp.ne.s32.totalorder %s71, %s74
      %p83 = scmp.eq.s32.totalorder %s24, 1
      %p84 = por %p82, %p83
      %p85 = scmp.ne.s32.totalorder %s74, %s75
      %p86 = scmp.eq.s32.totalorder %s24, 0
      %p87 = por %p85, %p86
      %p88 = scmp.ne.s32.totalorder %s74, %s75
      %p89 = scmp.eq.s32.totalorder %s25, 1
      %p90 = por %p88, %p89
      %p92 = scmp.ne.s32.totalorder %s75, %s91
      %p93 = scmp.eq.s32.totalorder %s25, 0
      %p94 = por %p92, %p93
      %s95 = ssub.s32 %s26, %s38
      %p96 = scmp.eq.s32.totalorder %s95, 0
      %s98 = sadd.s32 %s97, 1
      %s99 = scalar_select %p96, %s97, %s98
      %p102 = pneg %p96
      %p103 = scmp.eq.s32.totalorder %s19, 1
      %p104 = por %p102, %p103
      %p105 = scmp.ne.s32.totalorder %s97, %s100
      %p106 = scmp.eq.s32.totalorder %s19, 0
      %p107 = por %p105, %p106
      %p108 = scmp.ne.s32.totalorder %s97, %s100
      %p109 = scmp.eq.s32.totalorder %s24, 1
      %p110 = por %p108, %p109
      %p111 = scmp.ne.s32.totalorder %s100, %s101
      %p112 = scmp.eq.s32.totalorder %s24, 0
      %p113 = por %p111, %p112
      %p114 = scmp.ne.s32.totalorder %s100, %s101
      %p115 = scmp.eq.s32.totalorder %s25, 1
      %p116 = por %p114, %p115
      %p118 = scmp.ne.s32.totalorder %s101, %s117
      %p119 = scmp.eq.s32.totalorder %s25, 0
      %p120 = por %p118, %p119
      %p121 = scmp.le.s32.totalorder 1, %s19
      %p122 = scmp.lt.s32.totalorder %s19, 3
      %p123 = pnand %p121, %p122
      %p124 = pneg %p123
      // Predicated region
      $region9: #{tpu_custom_call.1} parent=5 // pred_check
        _
      $region10: #{tpu_custom_call.1} parent=5 // pred_check_branch
        %126 = sbr.rel (%p123) target = $region12
      $region11: #{tpu_custom_call.1} parent=5 // pred_region
        %s127 = ssub.s32 %s19, 1
      $region12: #{tpu_custom_call.1} parent=5 // pred_fallthru
        _
      %p128 = scmp.lt.s32.totalorder %s19, 2
      // Predicated region
      $region13: #{tpu_custom_call.1} parent=5 // pred_check
        %p129 = pneg %p128
      $region14: #{tpu_custom_call.1} parent=5 // pred_check_branch
        %131 = sbr.rel (%p129) target = $region16
      $region15: #{tpu_custom_call.1} parent=5 // pred_region
        // Predicated region
        $region17: #{tpu_custom_call.1} parent=15 // pred_check
          %p132 = pneg %p53
        $region18: #{tpu_custom_call.1} parent=15 // pred_check_branch
          %134 = sbr.rel (%p132) target = $region20
        $region19: #{tpu_custom_call.1} parent=15 // pred_region
          %s135 = sand.u32 %s43, 1
          %s136 = scalar_lea.sflag [#allocation6], %s135
          %s137 = sand.u32 %s43, 1
          %s138 = smul.addr %s137, 8
          %s139 = scalar_lea.vmem [#allocation5], %s138
          %s140 = sadd.s32 %s26, %s27
          %142 = vsyncadd %s136, 0
          %s143 = smul.addr %s140, 8
          %s144 = scalar_lea.hbm %s1, %s143
          %s146 = sshll.u32 %s144, 4
          %s147 = int_to_ptr.hbm [resolvable:$true] %s146
          %s148 = sshll.u32 %s139, 4
          %s149 = int_to_ptr.vmem [resolvable:$true] %s148
          %151 = dma.hbm_to_vmem [thread:$0]  %s147, 128, %s149, %s136
        $region20: #{tpu_custom_call.1} parent=15 // pred_fallthru
          _
        // Predicated region
        $region21: #{tpu_custom_call.1} parent=15 // pred_check
          %p152 = pneg %p81
        $region22: #{tpu_custom_call.1} parent=15 // pred_check_branch
          %154 = sbr.rel (%p152) target = $region24
        $region23: #{tpu_custom_call.1} parent=15 // pred_region
          %s155 = sand.u32 %s71, 1
          %s156 = scalar_lea.sflag [#allocation9], %s155
          %s157 = sand.u32 %s71, 1
          %s158 = smul.addr %s157, 8
          %s159 = scalar_lea.vmem [#allocation8], %s158
          %s160 = sadd.s32 %s26, %s27
          %162 = vsyncadd %s156, 0
          %s163 = smul.addr %s160, 8
          %s164 = scalar_lea.hbm %s2, %s163
          %s166 = sshll.u32 %s164, 4
          %s167 = int_to_ptr.hbm [resolvable:$true] %s166
          %s168 = sshll.u32 %s159, 4
          %s169 = int_to_ptr.vmem [resolvable:$true] %s168
          %171 = dma.hbm_to_vmem [thread:$0]  %s167, 128, %s169, %s156
        $region24: #{tpu_custom_call.1} parent=15 // pred_fallthru
          _
      $region16: #{tpu_custom_call.1} parent=5 // pred_fallthru
        _
      %p172 = scmp.le.s32.totalorder 1, %s19
      %p173 = scmp.lt.s32.totalorder %s19, 3
      %p174 = pnand %p172, %p173
      %p175 = pneg %p174
      // Predicated region
      $region25: #{tpu_custom_call.1} parent=5 // pred_check
        _
      $region26: #{tpu_custom_call.1} parent=5 // pred_check_branch
        %177 = sbr.rel (%p174) target = $region28
      $region27: #{tpu_custom_call.1} parent=5 // pred_region
        %s178 = ssub.s32 %s19, 1
        %s179 = sand.u32 %s46, 1
        %s180 = scalar_lea.sflag [#allocation6], %s179
        %s181 = sand.u32 %s46, 1
        %s182 = smul.addr %s181, 8
        %s183 = scalar_lea.vmem [#allocation5], %s182
        // Predicated region
        $region29: #{tpu_custom_call.1} parent=27 // pred_check
          %p184 = pneg %p59
        $region30: #{tpu_custom_call.1} parent=27 // pred_check_branch
          %186 = sbr.rel (%p184) target = $region32
        $region31: #{tpu_custom_call.1} parent=27 // pred_region
          %188 = dma.done %s180, 128
        $region32: #{tpu_custom_call.1} parent=27 // pred_fallthru
          _
        %s189 = sand.u32 %s74, 1
        %s190 = scalar_lea.sflag [#allocation9], %s189
        %s191 = sand.u32 %s74, 1
        %s192 = smul.addr %s191, 8
        %s193 = scalar_lea.vmem [#allocation8], %s192
        // Predicated region
        $region33: #{tpu_custom_call.1} parent=27 // pred_check
          %p194 = pneg %p87
        $region34: #{tpu_custom_call.1} parent=27 // pred_check_branch
          %196 = sbr.rel (%p194) target = $region36
        $region35: #{tpu_custom_call.1} parent=27 // pred_region
          %198 = dma.done %s190, 128
        $region36: #{tpu_custom_call.1} parent=27 // pred_fallthru
          _
        %s199 = sand.u32 %s46, 1
        %s200 = scalar_lea.sflag [#allocation6], %s199
        %s201 = sand.u32 %s46, 1
        %s202 = smul.addr %s201, 8
        %s203 = scalar_lea.vmem [#allocation5], %s202
        %p204 = pneg %p59
        %p205 = pneg %p56
        %s206 = sand.u32 %s74, 1
        %s207 = scalar_lea.sflag [#allocation9], %s206
        %s208 = sand.u32 %s74, 1
        %s209 = smul.addr %s208, 8
        %s210 = scalar_lea.vmem [#allocation8], %s209
        %p211 = pneg %p87
        %p212 = pneg %p84
        %p213 = pneg %p113
        %p214 = pneg %p110
        %s215 = sand.u32 %s100, 1
        %s216 = scalar_lea.sflag [#allocation7], %s215
        %s217 = sand.u32 %s100, 1
        %s218 = smul.addr %s217, 8
        %s219 = scalar_lea.vmem [#allocation10], %s218
        %s220 = sadd.s32 %s28, %s29
        %s221 = sadd.s32 %s28, %s29
        %p222 = scmp.eq.s32.totalorder %s29, 0
        // Predicated region
        $region37: #{tpu_custom_call.1} parent=27 // pred_check
          %p223 = pneg %p222
        $region38: #{tpu_custom_call.1} parent=27 // pred_check_branch
          %225 = sbr.rel (%p223) target = $region40
        $region39: #{tpu_custom_call.1} parent=27 // pred_region
          %vm226 = vcmask 7168
          %227 = vst.msk [vmem:[#allocation2] sm:$0xff] %vm226, 0.0
        $region40: #{tpu_custom_call.1} parent=27 // pred_fallthru
          _
        %s228 = sld [smem:[#allocation4]]
        %v229 = vld [vmem:[%s183] sm:$0xff]
        %v230 = vld [vmem:[%s193] sm:$0xff]
        %v231 = vstv %s228
        %v232 = vmul.f32 %v229, %v231
        %v233 = vmul.f32 %v230, %v231
        %vm234 = vcmask 261120
        %v235 = vsel %vm234, %v232, -inf
        %236 = vmax.xlane.f32.xlu0 %v235
        %v237 = vpop.xlane.xlu0 %236
        %v238 = vsub.f32 %v232, %v237
        %v239 = vmul.f32 %v238, 1.442695
        %v240 = vpow.pop %v239
        %v241 = vsel %vm234, %v240, 0.0
        %242 = vadd.xlane.f32.xlu0 %v241
        %v243 = vpop.xlane.xlu0 %242
        %v244 = vlog2.pop %v243
        %v245 = vmul.f32 %v244, 0.6931472
        %v246 = vsel %vm234, %v233, -inf
        %247 = vmax.xlane.f32.xlu0 %v246
        %v248 = vpop.xlane.xlu0 %247
        %v249 = vsub.f32 %v233, %v248
        %v250 = vmul.f32 %v249, 1.442695
        %v251 = vpow.pop %v250
        %v252 = vsel %vm234, %v251, 0.0
        %253 = vadd.xlane.f32.xlu0 %v252
        %v254 = vpop.xlane.xlu0 %253
        %v255 = vlog2.pop %v254
        %v256 = vmul.f32 %v255, 0.6931472
        %v257 = vsub.f32 %v249, %v238
        %v258 = vsub.f32 %v245, %v256
        %v259 = vadd.f32 %v257, %v258
        %v260 = vmul.f32 %v251, %v259
        %v261 = vsel %vm234, %v260, 0.0
        %262 = vadd.xlane.f32.xlu0 %v261
        %v263 = vpop.xlane.xlu0 %262
        %v264 = vrcp.pop %v254
        %v265 = vmul.f32 %v254, %v264
        %v266 = vsub.f32 1.0, %v265
        %v267 = vmul.f32 %v264, %v266
        %v268 = vadd.f32 %v264, %v267
        %vm269 = vweird.f32 %v254
        %vm270 = vweird.f32 %v264
        %vm271 = vmor %vm269, %vm270
        %v272 = vsel %vm271, %v264, %v268
        %v273 = vand.u32 2147483647, %v254
        %vm274 = vcmp.eq.f32.partialorder %v273, 8.507059e+37
        %v275 = vand.u32 %v254, 2147483648
        %v276 = vor.u32 1.1754944e-38, %v275
        %v277 = vsel %vm274, %v276, %v272
        %v278 = vmul.f32 %v263, %v277
        %v279 = vld [vmem:[#allocation2] sm:$0xff]
        %v280 = vadd.f32 %v279, %v278
        %vm281 = vcmask 7168
        %282 = vst.msk [vmem:[#allocation2] sm:$0xff] %vm281, %v280
        // Predicated region
        $region41: #{tpu_custom_call.1} parent=27 // pred_check
          %p283 = pneg %p222
        $region42: #{tpu_custom_call.1} parent=27 // pred_check_branch
          %285 = sbr.rel (%p283) target = $region44
        $region43: #{tpu_custom_call.1} parent=27 // pred_region
          %v286 = vld [vmem:[#allocation2] sm:$0xff]
          %v287 = vsel %vm281, %v286, 0.0
          %v288 = vrot.slane %v287, 4
          %v289 = vadd.f32 %v287, %v288
          %v290 = vrot.slane %v289, 2
          %v291 = vadd.f32 %v289, %v290
          %v292 = vrot.slane %v291, 1
          %v293 = vadd.f32 %v291, %v292
          %v294 = vmul.f32 %v293, 0.0625
          %296 = vset.pattern.permute.xlu0 0
          %297 = vperm.xlu0 %296, %v294
          %v298 = vpop.permute.xlu0 %297
          %300 = vst [vmem:[%s219] sm:$0xff] %v298
        $region44: #{tpu_custom_call.1} parent=27 // pred_fallthru
          _
        %s301 = sand.u32 %s100, 1
        %s302 = scalar_lea.sflag [#allocation7], %s301
        %s303 = sand.u32 %s100, 1
        %s304 = smul.addr %s303, 8
        %s305 = scalar_lea.vmem [#allocation10], %s304
        // Predicated region
        $region45: #{tpu_custom_call.1} parent=27 // pred_check
          %p306 = pneg %p110
        $region46: #{tpu_custom_call.1} parent=27 // pred_check_branch
          %308 = sbr.rel (%p306) target = $region48
        $region47: #{tpu_custom_call.1} parent=27 // pred_region
          %310 = vsyncadd %s302, 0
          %s311 = smul.addr %s28, 8
          %s312 = scalar_lea.hbm %s3, %s311
          %s314 = sshll.u32 %s305, 4
          %s315 = int_to_ptr.vmem [resolvable:$true] %s314
          %s316 = sshll.u32 %s312, 4
          %s317 = int_to_ptr.hbm [resolvable:$true] %s316
          %319 = dma.vmem_to_hbm [thread:$0]  %s315, 128, %s317, %s302
        $region48: #{tpu_custom_call.1} parent=27 // pred_fallthru
          _
      $region28: #{tpu_custom_call.1} parent=5 // pred_fallthru
        _
      %p320 = scmp.le.s32.totalorder 2, %s19
      // Predicated region
      $region49: #{tpu_custom_call.1} parent=5 // pred_check
        %p321 = pneg %p320
      $region50: #{tpu_custom_call.1} parent=5 // pred_check_branch
        %323 = sbr.rel (%p321) target = $region52
      $region51: #{tpu_custom_call.1} parent=5 // pred_region
        %s324 = ssub.s32 %s19, 2
        // Predicated region
        $region53: #{tpu_custom_call.1} parent=51 // pred_check
          %p325 = pneg %p116
        $region54: #{tpu_custom_call.1} parent=51 // pred_check_branch
          %327 = sbr.rel (%p325) target = $region56
        $region55: #{tpu_custom_call.1} parent=51 // pred_region
          %s328 = sand.u32 %s101, 1
          %s329 = scalar_lea.sflag [#allocation7], %s328
          %s330 = sand.u32 %s101, 1
          %s331 = smul.addr %s330, 8
          %s332 = scalar_lea.vmem [#allocation10], %s331
          %334 = dma.done %s329, 128
        $region56: #{tpu_custom_call.1} parent=51 // pred_fallthru
          _
      $region52: #{tpu_custom_call.1} parent=5 // pred_fallthru
        _
    $region6: #{tpu_custom_call.1} parent=1 // loop_footer
      %s23 = sadd.s32 1, %s19
    $region7: #{tpu_custom_call.1} parent=1 // loop_footer_branch
      %18 = sbr.rel target = $region3
    $region8: #{tpu_custom_call.1} parent=1 // loop_exit
      _
    %335 = vsyncpa [#allocation6], 1
    %s336 = scalar_lea.sflag [#allocation6], 1
    %337 = vsyncpa %s336, 1
    %338 = vsyncpa [#allocation9], 1
    %s339 = scalar_lea.sflag [#allocation9], 1
    %340 = vsyncpa %s339, 1
    %341 = vsyncpa [#allocation7], 1
    %s342 = scalar_lea.sflag [#allocation7], 1
    %343 = vsyncpa %s342, 1

</llo_original>
